<compile_context>
chip_gen: v7x
topology: tpu7x:2x2x1
jax: 0.10.0
libtpu: 0.0.40
codegen_flags: <defaults>
</compile_context>

<pallas_src>
import jax
import jax.numpy as jnp
from jax import lax
from jax.experimental import pallas as pl
from jax.experimental.pallas import tpu as pltpu

# ---------------- problem sizes (small, consistent with the module) ----------------
VOCAB_LEN = 50          # vocab.__len__()
EMBED_DIM = 32          # params.EMBED_DIM
EMBED_MAX_NORM = 1.0    # params.EMBED_MAX_NORM
BATCH = 8               # n_examples
N_CONTEXT = 8           # context words per example
_RENORM_EPS = 1e-7      # torch renorm eps (reference only; kernel uses rsqrt, diff O(1e-7))


def _w2v_fused_kernel(tab_ref, idx_ref, o_ref):
    """Fused embedding gather (one MXU matmul) + max_norm renorm + per-pair dot.

    tab_ref : (2*Vp, D)   f32  row-stacked [target table ; context table], zero-padded
    idx_ref : (2*B*C, 1)  i32  [target ids repeated per context slot ; context ids + Vp]
    o_ref   : (B*C, 1)    f32  dot(target_row[b], context_row[b, c]) flattened over (b, c)
    """
    K, D = tab_ref.shape          # (2*Vp, D) = (256, 32)
    M = idx_ref.shape[0]          # 2*B*C     = 128
    BC = M // 2

    # Single in-kernel gather via exact one-hot matmul (0/1 weights -> exact row copies).
    # K = 2*Vp = 256 fills the v6e/v7x MXU in one push; two native passes on v5e.
    one_hot = (idx_ref[...] ==
               lax.broadcasted_iota(jnp.int32, (M, K), 1)).astype(jnp.float32)   # (M, K)
    rows = jnp.dot(one_hot, tab_ref[...], preferred_element_type=jnp.float32)    # (M, D)

    # nn.Embedding(max_norm=...) semantics, applied AFTER the gather (per-row rescale
    # commutes with exact row selection). sqrt+div replaced by one EUP rsqrt
    # (drops torch's +1e-7 eps; O(1e-7) relative difference).
    max_sq = jnp.float32(EMBED_MAX_NORM * EMBED_MAX_NORM)
    sq = jnp.sum(rows * rows, axis=-1, keepdims=True)                            # (M, 1)
    scale = jnp.where(sq > max_sq, EMBED_MAX_NORM * lax.rsqrt(sq), jnp.float32(1.0))
    rows = rows * scale

    # bmm replacement, fully 2D: targets were gathered pre-repeated per context slot,
    # so this is just an elementwise multiply + one lane reduce over D.
    t_rows = rows[:BC, :]                                                        # (B*C, D)
    c_rows = rows[BC:, :]                                                        # (B*C, D)
    o_ref[...] = jnp.sum(t_rows * c_rows, axis=-1, keepdims=True)                # (B*C, 1)


def word2vec_forward(t_table, c_table, inputs, context):
    """t_table/c_table: (V+1, D) f32; inputs: (B,) i32; context: (B, C) i32 -> (B, C) f32."""
    V1, D = t_table.shape
    B, C = context.shape
    BC = B * C

    # Pad each vocab table to a lane-aligned contraction chunk, then row-stack the two
    # tables into a single operand (zero rows are never selected by any valid index).
    Vp = ((V1 + 127) // 128) * 128
    pad = Vp - V1
    t_tab_p = jnp.pad(t_table, ((0, pad), (0, 0))) if pad else t_table
    c_tab_p = jnp.pad(c_table, ((0, pad), (0, 0))) if pad else c_table
    tab = jnp.concatenate([t_tab_p, c_tab_p], axis=0)                 # (2*Vp, D)

    # Single index operand: target id repeated for each context slot, then context ids
    # offset by +Vp so they address the context half of the stacked table.
    t_rep = jnp.repeat(inputs.astype(jnp.int32), C)                    # (B*C,)
    c_ids = context.astype(jnp.int32).reshape(-1) + jnp.int32(Vp)      # (B*C,)
    idx = jnp.concatenate([t_rep, c_ids]).reshape(2 * BC, 1)           # (2*B*C, 1)

    dots = pl.pallas_call(
        _w2v_fused_kernel,
        out_shape=jax.ShapeDtypeStruct((BC, 1), jnp.float32),
        in_specs=[
            pl.BlockSpec(memory_space=pltpu.MemorySpace.VMEM),  # stacked tables
            pl.BlockSpec(memory_space=pltpu.MemorySpace.VMEM),  # combined ids
        ],
        out_specs=pl.BlockSpec(memory_space=pltpu.MemorySpace.VMEM),
        # No grid: everything fits trivially in VMEM on v5e/v6e/v7x; a grid would only
        # add serial per-step overhead at these sizes.
    )(tab, idx)

    # (B*C, 1) -> (B, C): pure metadata reshape outside the kernel.
    return dots.reshape(B, C)


def _reference(t_table, c_table, inputs, context):
    """Pure-JAX reference mirroring the PyTorch forward (incl. max_norm with torch eps)."""
    def renorm(rows):
        n = jnp.sqrt(jnp.sum(rows * rows, axis=-1, keepdims=True))
        s = jnp.where(n > EMBED_MAX_NORM, EMBED_MAX_NORM / (n + _RENORM_EPS), 1.0)
        return rows * s

    t = renorm(jnp.take(t_table, inputs, axis=0))                              # (B, D)
    c = renorm(jnp.take(c_table, context.reshape(-1), axis=0)).reshape(
        context.shape[0], context.shape[1], -1)                                # (B, C, D)
    return jnp.einsum('bd,bcd->bc', t, c)


if __name__ == "__main__":
    key = jax.random.PRNGKey(0)
    k1, k2, k3, k4 = jax.random.split(key, 4)

    # Deterministic parameter init (nn.Embedding default init ~ N(0, 1)).
    t_table = jax.random.normal(k1, (VOCAB_LEN + 1, EMBED_DIM), dtype=jnp.float32)
    c_table = jax.random.normal(k2, (VOCAB_LEN + 1, EMBED_DIM), dtype=jnp.float32)

    inputs = jax.random.randint(k3, (BATCH,), 0, VOCAB_LEN + 1, dtype=jnp.int32)
    context = jax.random.randint(k4, (BATCH, N_CONTEXT), 0, VOCAB_LEN + 1, dtype=jnp.int32)

    out = word2vec_forward(t_table, c_table, inputs, context)
    out = jax.block_until_ready(out)

    ref = _reference(t_table, c_table, inputs, context)
    assert out.shape == (BATCH, N_CONTEXT), out.shape
    assert jnp.allclose(out, ref, atol=1e-4, rtol=1e-4), "mismatch vs reference"

    print("KERNEL_OK")
</pallas_src>

<mosaic_0001>
module attributes {stable_mosaic.version = 11 : i64} {
  func.func @_w2v_fused_kernel(%arg0: memref<256x32xf32, #tpu.memory_space<vmem>>, %arg1: memref<128x1xi32, #tpu.memory_space<vmem>>, %arg2: memref<64x1xf32, #tpu.memory_space<vmem>>) attributes {dimension_semantics = [], scalar_prefetch = 0 : i64, scratch_operands = 0 : i64, tpu.core_type = #tpu.core_type<tc>} {
    %c0 = arith.constant 0 : index
    %c0_0 = arith.constant 0 : index
    %0 = vector.load %arg1[%c0, %c0_0] : memref<128x1xi32, #tpu.memory_space<vmem>>, vector<128x1xi32>
    %1 = tpu.iota {dimensions = array<i32: 1>} : vector<128x256xi32>
    %2 = vector.broadcast %0 : vector<128x1xi32> to vector<128x256xi32>
    %3 = arith.cmpi eq, %2, %1 : vector<128x256xi32>
    %4 = arith.extui %3 : vector<128x256xi1> to vector<128x256xi32>
    %5 = arith.sitofp %4 : vector<128x256xi32> to vector<128x256xf32>
    %c0_1 = arith.constant 0 : index
    %c0_2 = arith.constant 0 : index
    %6 = vector.load %arg0[%c0_1, %c0_2] : memref<256x32xf32, #tpu.memory_space<vmem>>, vector<256x32xf32>
    %cst = arith.constant dense<0.000000e+00> : vector<128x32xf32>
    %7 = tpu.matmul %5, %6, %cst {dimension_numbers = #tpu.dot_dimension_numbers<[1], [0], [0], [1], [0, 0, 1, 1], [], []>} : vector<128x256xf32>, vector<256x32xf32>, vector<128x32xf32> -> vector<128x32xf32>
    %8 = arith.mulf %7, %7 : vector<128x32xf32>
    %cst_3 = arith.constant dense<0.000000e+00> : vector<128xf32>
    %9 = vector.multi_reduction <add>, %8, %cst_3 [1] : vector<128x32xf32> to vector<128xf32>
    %10 = vector.shape_cast %9 : vector<128xf32> to vector<128x1xf32>
    %cst_4 = arith.constant 1.000000e+00 : f32
    %11 = vector.broadcast %cst_4 : f32 to vector<128x1xf32>
    %12 = arith.cmpf ogt, %10, %11 : vector<128x1xf32>
    %13 = math.rsqrt %10 : vector<128x1xf32>
    %cst_5 = arith.constant 1.000000e+00 : f32
    %14 = vector.broadcast %cst_5 : f32 to vector<128x1xf32>
    %15 = arith.mulf %14, %13 : vector<128x1xf32>
    %cst_6 = arith.constant 1.000000e+00 : f32
    %16 = vector.broadcast %cst_6 : f32 to vector<128x1xf32>
    %17 = arith.select %12, %15, %16 : vector<128x1xi1>, vector<128x1xf32>
    %18 = vector.broadcast %17 : vector<128x1xf32> to vector<128x32xf32>
    %19 = arith.mulf %7, %18 : vector<128x32xf32>
    %20 = vector.extract_strided_slice %19 {offsets = [0, 0], sizes = [64, 32], strides = [1, 1]} : vector<128x32xf32> to vector<64x32xf32>
    %21 = vector.extract_strided_slice %19 {offsets = [64, 0], sizes = [64, 32], strides = [1, 1]} : vector<128x32xf32> to vector<64x32xf32>
    %22 = arith.mulf %20, %21 : vector<64x32xf32>
    %cst_7 = arith.constant dense<0.000000e+00> : vector<64xf32>
    %23 = vector.multi_reduction <add>, %22, %cst_7 [1] : vector<64x32xf32> to vector<64xf32>
    %24 = vector.shape_cast %23 : vector<64xf32> to vector<64x1xf32>
    %c0_8 = arith.constant 0 : index
    %c0_9 = arith.constant 0 : index
    %25 = vector.load %arg2[%c0_8, %c0_9] : memref<64x1xf32, #tpu.memory_space<vmem>>, vector<64x1xf32>
    tpu.vector_store %arg2[%c0_8, %c0_9], %24 {strides = array<i32>} : memref<64x1xf32, #tpu.memory_space<vmem>>, vector<64x1xf32>,
    return
  }
}

</mosaic_0001>

<llo_original>
// kernel: tpu_custom_call.1
$region0: #{tpu_custom_call.1}
  #allocation0 [shape = 'u32[]', space=smem, size = 0x4, offset = 0x4, fixed_abs, tag = 'smem constant byte address 0x4 - core index']
  #allocation1 [shape = 'u32[144,128]{1,0:T(1,128)}', space=vmem, size = 0x12000, scoped, tag = 'internal scratch']
  %s0 = inlined_call_operand.vmem [shape: f32[256,32], index: 0, kind: input, shape index: {}]
  %s1 = inlined_call_operand.vmem [shape: s32[128,1], index: 1, kind: input, shape index: {}]
  %s2 = inlined_call_operand.vmem [shape: f32[64,1], index: 2, kind: output, shape index: {}]
  %s3 = sld [smem:[#allocation0]]
  $region18: #{tpu_custom_call.1} parent=0
    _
  %s5 = ssub.s32 1, %s3
  %s6 = scalar_select 0, %s5, %s3
  // Predicated region
  $region2: #{tpu_custom_call.1} parent=0 // pred_check
    _
  $region3: #{tpu_custom_call.1} parent=0 // pred_check_branch
    %8 = sbr.rel (0) target = $region5
  $region4: #{tpu_custom_call.1} parent=0 // pred_region
    _
  $region5: #{tpu_custom_call.1} parent=0 // pred_fallthru
    _
  // Predicated region
  $region6: #{tpu_custom_call.1} parent=0 // pred_check
    _
  $region7: #{tpu_custom_call.1} parent=0 // pred_check_branch
    %10 = sbr.rel (0) target = $region9
  $region8: #{tpu_custom_call.1} parent=0 // pred_region
    _
  $region9: #{tpu_custom_call.1} parent=0 // pred_fallthru
    _
  %v11 = vld [vmem:[%s1] sm:$0xff]
  %v12 = vld [vmem:[%s1 + $0x8] sm:$0xff]
  %v13 = vld [vmem:[%s1 + $0x10] sm:$0xff]
  %v14 = vld [vmem:[%s1 + $0x18] sm:$0xff]
  %v15 = vld [vmem:[%s1 + $0x20] sm:$0xff]
  %v16 = vld [vmem:[%s1 + $0x28] sm:$0xff]
  %v17 = vld [vmem:[%s1 + $0x30] sm:$0xff]
  %v18 = vld [vmem:[%s1 + $0x38] sm:$0xff]
  %v19 = vld [vmem:[%s1 + $0x40] sm:$0xff]
  %v20 = vld [vmem:[%s1 + $0x48] sm:$0xff]
  %v21 = vld [vmem:[%s1 + $0x50] sm:$0xff]
  %v22 = vld [vmem:[%s1 + $0x58] sm:$0xff]
  %v23 = vld [vmem:[%s1 + $0x60] sm:$0xff]
  %v24 = vld [vmem:[%s1 + $0x68] sm:$0xff]
  %v25 = vld [vmem:[%s1 + $0x70] sm:$0xff]
  %v26 = vld [vmem:[%s1 + $0x78] sm:$0xff]
  %v27 = vlaneseq
  %v28 = vand.u32 %v27, 127
  %v29 = vadd.s32 %v28, 128
  %30 = vset.pattern.permute.xlu0 0
  %31 = vperm.xlu0 %30, %v11
  %v32 = vpop.permute.xlu0 %31
  %33 = vset.pattern.permute.xlu0 0
  %34 = vperm.xlu0 %33, %v12
  %v35 = vpop.permute.xlu0 %34
  %36 = vset.pattern.permute.xlu0 0
  %37 = vperm.xlu0 %36, %v13
  %v38 = vpop.permute.xlu0 %37
  %39 = vset.pattern.permute.xlu0 0
  %40 = vperm.xlu0 %39, %v14
  %v41 = vpop.permute.xlu0 %40
  %42 = vset.pattern.permute.xlu0 0
  %43 = vperm.xlu0 %42, %v15
  %v44 = vpop.permute.xlu0 %43
  %45 = vset.pattern.permute.xlu0 0
  %46 = vperm.xlu0 %45, %v16
  %v47 = vpop.permute.xlu0 %46
  %48 = vset.pattern.permute.xlu0 0
  %49 = vperm.xlu0 %48, %v17
  %v50 = vpop.permute.xlu0 %49
  %51 = vset.pattern.permute.xlu0 0
  %52 = vperm.xlu0 %51, %v18
  %v53 = vpop.permute.xlu0 %52
  %54 = vset.pattern.permute.xlu0 0
  %55 = vperm.xlu0 %54, %v19
  %v56 = vpop.permute.xlu0 %55
  %57 = vset.pattern.permute.xlu0 0
  %58 = vperm.xlu0 %57, %v20
  %v59 = vpop.permute.xlu0 %58
  %60 = vset.pattern.permute.xlu0 0
  %61 = vperm.xlu0 %60, %v21
  %v62 = vpop.permute.xlu0 %61
  %63 = vset.pattern.permute.xlu0 0
  %64 = vperm.xlu0 %63, %v22
  %v65 = vpop.permute.xlu0 %64
  %66 = vset.pattern.permute.xlu0 0
  %67 = vperm.xlu0 %66, %v23
  %v68 = vpop.permute.xlu0 %67
  %69 = vset.pattern.permute.xlu0 0
  %70 = vperm.xlu0 %69, %v24
  %v71 = vpop.permute.xlu0 %70
  %72 = vset.pattern.permute.xlu0 0
  %73 = vperm.xlu0 %72, %v25
  %v74 = vpop.permute.xlu0 %73
  %75 = vset.pattern.permute.xlu0 0
  %76 = vperm.xlu0 %75, %v26
  %v77 = vpop.permute.xlu0 %76
  %vm78 = vcmp.eq.s32.totalorder %v32, %v28
  %vm79 = vcmp.eq.s32.totalorder %v32, %v29
  %vm80 = vcmp.eq.s32.totalorder %v35, %v28
  %vm81 = vcmp.eq.s32.totalorder %v35, %v29
  %vm82 = vcmp.eq.s32.totalorder %v38, %v28
  %vm83 = vcmp.eq.s32.totalorder %v38, %v29
  %vm84 = vcmp.eq.s32.totalorder %v41, %v28
  %vm85 = vcmp.eq.s32.totalorder %v41, %v29
  %vm86 = vcmp.eq.s32.totalorder %v44, %v28
  %vm87 = vcmp.eq.s32.totalorder %v44, %v29
  %vm88 = vcmp.eq.s32.totalorder %v47, %v28
  %vm89 = vcmp.eq.s32.totalorder %v47, %v29
  %vm90 = vcmp.eq.s32.totalorder %v50, %v28
  %vm91 = vcmp.eq.s32.totalorder %v50, %v29
  %vm92 = vcmp.eq.s32.totalorder %v53, %v28
  %vm93 = vcmp.eq.s32.totalorder %v53, %v29
  %vm94 = vcmp.eq.s32.totalorder %v56, %v28
  %vm95 = vcmp.eq.s32.totalorder %v56, %v29
  %vm96 = vcmp.eq.s32.totalorder %v59, %v28
  %vm97 = vcmp.eq.s32.totalorder %v59, %v29
  %vm98 = vcmp.eq.s32.totalorder %v62, %v28
  %vm99 = vcmp.eq.s32.totalorder %v62, %v29
  %vm100 = vcmp.eq.s32.totalorder %v65, %v28
  %vm101 = vcmp.eq.s32.totalorder %v65, %v29
  %vm102 = vcmp.eq.s32.totalorder %v68, %v28
  %vm103 = vcmp.eq.s32.totalorder %v68, %v29
  %vm104 = vcmp.eq.s32.totalorder %v71, %v28
  %vm105 = vcmp.eq.s32.totalorder %v71, %v29
  %vm106 = vcmp.eq.s32.totalorder %v74, %v28
  %vm107 = vcmp.eq.s32.totalorder %v74, %v29
  %vm108 = vcmp.eq.s32.totalorder %v77, %v28
  %vm109 = vcmp.eq.s32.totalorder %v77, %v29
  %v110 = vsel %vm78, 1, 0
  %v111 = vsel %vm79, 1, 0
  %v112 = vsel %vm80, 1, 0
  %v113 = vsel %vm81, 1, 0
  %v114 = vsel %vm82, 1, 0
  %v115 = vsel %vm83, 1, 0
  %v116 = vsel %vm84, 1, 0
  %v117 = vsel %vm85, 1, 0
  %v118 = vsel %vm86, 1, 0
  %v119 = vsel %vm87, 1, 0
  %v120 = vsel %vm88, 1, 0
  %v121 = vsel %vm89, 1, 0
  %v122 = vsel %vm90, 1, 0
  %v123 = vsel %vm91, 1, 0
  %v124 = vsel %vm92, 1, 0
  %v125 = vsel %vm93, 1, 0
  %v126 = vsel %vm94, 1, 0
  %v127 = vsel %vm95, 1, 0
  %v128 = vsel %vm96, 1, 0
  %v129 = vsel %vm97, 1, 0
  %v130 = vsel %vm98, 1, 0
  %v131 = vsel %vm99, 1, 0
  %v132 = vsel %vm100, 1, 0
  %v133 = vsel %vm101, 1, 0
  %v134 = vsel %vm102, 1, 0
  %v135 = vsel %vm103, 1, 0
  %v136 = vsel %vm104, 1, 0
  %v137 = vsel %vm105, 1, 0
  %v138 = vsel %vm106, 1, 0
  %v139 = vsel %vm107, 1, 0
  %v140 = vsel %vm108, 1, 0
  %v141 = vsel %vm109, 1, 0
  %v142 = vcvt.s32.f32 %v110
  %v143 = vcvt.s32.f32 %v111
  %v144 = vcvt.s32.f32 %v112
  %v145 = vcvt.s32.f32 %v113
  %v146 = vcvt.s32.f32 %v114
  %v147 = vcvt.s32.f32 %v115
  %v148 = vcvt.s32.f32 %v116
  %v149 = vcvt.s32.f32 %v117
  %v150 = vcvt.s32.f32 %v118
  %v151 = vcvt.s32.f32 %v119
  %v152 = vcvt.s32.f32 %v120
  %v153 = vcvt.s32.f32 %v121
  %v154 = vcvt.s32.f32 %v122
  %v155 = vcvt.s32.f32 %v123
  %v156 = vcvt.s32.f32 %v124
  %v157 = vcvt.s32.f32 %v125
  %v158 = vcvt.s32.f32 %v126
  %v159 = vcvt.s32.f32 %v127
  %v160 = vcvt.s32.f32 %v128
  %v161 = vcvt.s32.f32 %v129
  %v162 = vcvt.s32.f32 %v130
  %v163 = vcvt.s32.f32 %v131
  %v164 = vcvt.s32.f32 %v132
  %v165 = vcvt.s32.f32 %v133
  %v166 = vcvt.s32.f32 %v134
  %v167 = vcvt.s32.f32 %v135
  %v168 = vcvt.s32.f32 %v136
  %v169 = vcvt.s32.f32 %v137
  %v170 = vcvt.s32.f32 %v138
  %v171 = vcvt.s32.f32 %v139
  %v172 = vcvt.s32.f32 %v140
  %v173 = vcvt.s32.f32 %v141
  %v174 = vld [vmem:[%s0] sm:$0xff]
  %v175 = vld [vmem:[%s0 + $0x8] sm:$0xff]
  %v176 = vld [vmem:[%s0 + $0x10] sm:$0xff]
  %v177 = vld [vmem:[%s0 + $0x18] sm:$0xff]
  %v178 = vld [vmem:[%s0 + $0x20] sm:$0xff]
  %v179 = vld [vmem:[%s0 + $0x28] sm:$0xff]
  %v180 = vld [vmem:[%s0 + $0x30] sm:$0xff]
  %v181 = vld [vmem:[%s0 + $0x38] sm:$0xff]
  %v182 = vld [vmem:[%s0 + $0x40] sm:$0xff]
  %v183 = vld [vmem:[%s0 + $0x48] sm:$0xff]
  %v184 = vld [vmem:[%s0 + $0x50] sm:$0xff]
  %v185 = vld [vmem:[%s0 + $0x58] sm:$0xff]
  %v186 = vld [vmem:[%s0 + $0x60] sm:$0xff]
  %v187 = vld [vmem:[%s0 + $0x68] sm:$0xff]
  %v188 = vld [vmem:[%s0 + $0x70] sm:$0xff]
  %v189 = vld [vmem:[%s0 + $0x78] sm:$0xff]
  %v190 = vld [vmem:[%s0 + $0x80] sm:$0xff]
  %v191 = vld [vmem:[%s0 + $0x88] sm:$0xff]
  %v192 = vld [vmem:[%s0 + $0x90] sm:$0xff]
  %v193 = vld [vmem:[%s0 + $0x98] sm:$0xff]
  %v194 = vld [vmem:[%s0 + $0xa0] sm:$0xff]
  %v195 = vld [vmem:[%s0 + $0xa8] sm:$0xff]
  %v196 = vld [vmem:[%s0 + $0xb0] sm:$0xff]
  %v197 = vld [vmem:[%s0 + $0xb8] sm:$0xff]
  %v198 = vld [vmem:[%s0 + $0xc0] sm:$0xff]
  %v199 = vld [vmem:[%s0 + $0xc8] sm:$0xff]
  %v200 = vld [vmem:[%s0 + $0xd0] sm:$0xff]
  %v201 = vld [vmem:[%s0 + $0xd8] sm:$0xff]
  %v202 = vld [vmem:[%s0 + $0xe0] sm:$0xff]
  %v203 = vld [vmem:[%s0 + $0xe8] sm:$0xff]
  %v204 = vld [vmem:[%s0 + $0xf0] sm:$0xff]
  %v205 = vld [vmem:[%s0 + $0xf8] sm:$0xff]
  %206 = vmatprep.subr.mxu0 0.0
  %207 = vmatpush1.msra.mxu0 %v174
  %208 = vmatprep.subr.mxu0 0.0
  %209 = vmatpush1.msra.mxu0 %v175
  %210 = vmatprep.subr.mxu0 0.0
  %211 = vmatpush1.msra.mxu0 %v176
  %212 = vmatprep.subr.mxu0 0.0
  %213 = vmatpush1.msra.mxu0 %v177
  %214 = vmatprep.subr.mxu0 0.0
  %215 = vmatpush1.msra.mxu0 %v178
  %216 = vmatprep.subr.mxu0 0.0
  %217 = vmatpush1.msra.mxu0 %v179
  %218 = vmatprep.subr.mxu0 0.0
  %219 = vmatpush1.msra.mxu0 %v180
  %220 = vmatprep.subr.mxu0 0.0
  %221 = vmatpush1.msra.mxu0 %v181
  %222 = vmatprep.subr.mxu0 0.0
  %223 = vmatpush1.msra.mxu0 %v182
  %224 = vmatprep.subr.mxu0 0.0
  %225 = vmatpush1.msra.mxu0 %v183
  %226 = vmatprep.subr.mxu0 0.0
  %227 = vmatpush1.msra.mxu0 %v184
  %228 = vmatprep.subr.mxu0 0.0
  %229 = vmatpush1.msra.mxu0 %v185
  %230 = vmatprep.subr.mxu0 0.0
  %231 = vmatpush1.msra.mxu0 %v186
  %232 = vmatprep.subr.mxu0 0.0
  %233 = vmatpush1.msra.mxu0 %v187
  %234 = vmatprep.subr.mxu0 0.0
  %235 = vmatpush1.msra.mxu0 %v188
  %236 = vmatprep.subr.mxu0 0.0
  %237 = vmatpush1.msra.mxu0 %v189
  %238 = vmatprep.subr.mxu0 0.0
  %239 = vmatpush1.msra.mxu0 %v190
  %240 = vmatprep.subr.mxu0 0.0
  %241 = vmatpush1.msra.mxu0 %v191
  %242 = vmatprep.subr.mxu0 0.0
  %243 = vmatpush1.msra.mxu0 %v192
  %244 = vmatprep.subr.mxu0 0.0
  %245 = vmatpush1.msra.mxu0 %v193
  %246 = vmatprep.subr.mxu0 0.0
  %247 = vmatpush1.msra.mxu0 %v194
  %248 = vmatprep.subr.mxu0 0.0
  %249 = vmatpush1.msra.mxu0 %v195
  %250 = vmatprep.subr.mxu0 0.0
  %251 = vmatpush1.msra.mxu0 %v196
  %252 = vmatprep.subr.mxu0 0.0
  %253 = vmatpush1.msra.mxu0 %v197
  %254 = vmatprep.subr.mxu0 0.0
  %255 = vmatpush1.msra.mxu0 %v198
  %256 = vmatprep.subr.mxu0 0.0
  %257 = vmatpush1.msra.mxu0 %v199
  %258 = vmatprep.subr.mxu0 0.0
  %259 = vmatpush1.msra.mxu0 %v200
  %260 = vmatprep.subr.mxu0 0.0
  %261 = vmatpush1.msra.mxu0 %v201
  %262 = vmatprep.subr.mxu0 0.0
  %263 = vmatpush1.msra.mxu0 %v202
  %264 = vmatprep.subr.mxu0 0.0
  %265 = vmatpush1.msra.mxu0 %v203
  %266 = vmatprep.subr.mxu0 0.0
  %267 = vmatpush1.msra.mxu0 %v204
  %268 = vmatprep.subr.mxu0 0.0
  %269 = vmatpush1.msra.mxu0 %v205
  %270 = vmatprep.mubr.f32.mxu0 %v143
  %271 = vmatmul.mubr.f32.gmra.mrb[0].mxu0 %v142
  %v272 = vpop.f32.mrb[0].mxu0
  %v273 = vadd.f32 0.0, %v272
  %v274 = vpop.f32.mrb[0].mxu0
  %275 = vmatprep.mubr.f32.mxu0 %v145
  %276 = vmatmul.mubr.f32.gmra.mrb[0].mxu0 %v144
  %v277 = vpop.f32.mrb[0].mxu0
  %v278 = vadd.f32 0.0, %v277
  %v279 = vpop.f32.mrb[0].mxu0
  %280 = vmatprep.mubr.f32.mxu0 %v147
  %281 = vmatmul.mubr.f32.gmra.mrb[0].mxu0 %v146
  %v282 = vpop.f32.mrb[0].mxu0
  %v283 = vadd.f32 0.0, %v282
  %v284 = vpop.f32.mrb[0].mxu0
  %285 = vmatprep.mubr.f32.mxu0 %v149
  %286 = vmatmul.mubr.f32.gmra.mrb[0].mxu0 %v148
  %v287 = vpop.f32.mrb[0].mxu0
  %v288 = vadd.f32 0.0, %v287
  %v289 = vpop.f32.mrb[0].mxu0
  %290 = vmatprep.mubr.f32.mxu0 %v151
  %291 = vmatmul.mubr.f32.gmra.mrb[0].mxu0 %v150
  %v292 = vpop.f32.mrb[0].mxu0
  %v293 = vadd.f32 0.0, %v292
  %v294 = vpop.f32.mrb[0].mxu0
  %295 = vmatprep.mubr.f32.mxu0 %v153
  %296 = vmatmul.mubr.f32.gmra.mrb[0].mxu0 %v152
  %v297 = vpop.f32.mrb[0].mxu0
  %v298 = vadd.f32 0.0, %v297
  %v299 = vpop.f32.mrb[0].mxu0
  %300 = vmatprep.mubr.f32.mxu0 %v155
  %301 = vmatmul.mubr.f32.gmra.mrb[0].mxu0 %v154
  %v302 = vpop.f32.mrb[0].mxu0
  %v303 = vadd.f32 0.0, %v302
  %v304 = vpop.f32.mrb[0].mxu0
  %305 = vmatprep.mubr.f32.mxu0 %v157
  %306 = vmatmul.mubr.f32.gmra.mrb[0].mxu0 %v156
  %v307 = vpop.f32.mrb[0].mxu0
  %v308 = vadd.f32 0.0, %v307
  %v309 = vpop.f32.mrb[0].mxu0
  %310 = vmatprep.mubr.f32.mxu0 %v159
  %311 = vmatmul.mubr.f32.gmra.mrb[0].mxu0 %v158
  %v312 = vpop.f32.mrb[0].mxu0
  %v313 = vadd.f32 0.0, %v312
  %v314 = vpop.f32.mrb[0].mxu0
  %315 = vmatprep.mubr.f32.mxu0 %v161
  %316 = vmatmul.mubr.f32.gmra.mrb[0].mxu0 %v160
  %v317 = vpop.f32.mrb[0].mxu0
  %v318 = vadd.f32 0.0, %v317
  %v319 = vpop.f32.mrb[0].mxu0
  %320 = vmatprep.mubr.f32.mxu0 %v163
  %321 = vmatmul.mubr.f32.gmra.mrb[0].mxu0 %v162
  %v322 = vpop.f32.mrb[0].mxu0
  %v323 = vadd.f32 0.0, %v322
  %v324 = vpop.f32.mrb[0].mxu0
  %325 = vmatprep.mubr.f32.mxu0 %v165
  %326 = vmatmul.mubr.f32.gmra.mrb[0].mxu0 %v164
  %v327 = vpop.f32.mrb[0].mxu0
  %v328 = vadd.f32 0.0, %v327
  %v329 = vpop.f32.mrb[0].mxu0
  %330 = vmatprep.mubr.f32.mxu0 %v167
  %331 = vmatmul.mubr.f32.gmra.mrb[0].mxu0 %v166
  %v332 = vpop.f32.mrb[0].mxu0
  %v333 = vadd.f32 0.0, %v332
  %v334 = vpop.f32.mrb[0].mxu0
  %335 = vmatprep.mubr.f32.mxu0 %v169
  %336 = vmatmul.mubr.f32.gmra.mrb[0].mxu0 %v168
  %v337 = vpop.f32.mrb[0].mxu0
  %v338 = vadd.f32 0.0, %v337
  %v339 = vpop.f32.mrb[0].mxu0
  %340 = vmatprep.mubr.f32.mxu0 %v171
  %341 = vmatmul.mubr.f32.gmra.mrb[0].mxu0 %v170
  %v342 = vpop.f32.mrb[0].mxu0
  %v343 = vadd.f32 0.0, %v342
  %v344 = vpop.f32.mrb[0].mxu0
  %345 = vmatprep.mubr.f32.mxu0 %v173
  %346 = vmatmul.mubr.f32.gmra.mrb[0].mxu0 %v172
  %v347 = vpop.f32.mrb[0].mxu0
  %v348 = vadd.f32 0.0, %v347
  %v349 = vpop.f32.mrb[0].mxu0
  %350 = vdwg.mxu0
  %v351 = vmul.f32 %v273, %v273
  %v352 = vmul.f32 %v278, %v278
  %v353 = vmul.f32 %v283, %v283
  %v354 = vmul.f32 %v288, %v288
  %v355 = vmul.f32 %v293, %v293
  %v356 = vmul.f32 %v298, %v298
  %v357 = vmul.f32 %v303, %v303
  %v358 = vmul.f32 %v308, %v308
  %v359 = vmul.f32 %v313, %v313
  %v360 = vmul.f32 %v318, %v318
  %v361 = vmul.f32 %v323, %v323
  %v362 = vmul.f32 %v328, %v328
  %v363 = vmul.f32 %v333, %v333
  %v364 = vmul.f32 %v338, %v338
  %v365 = vmul.f32 %v343, %v343
  %v366 = vmul.f32 %v348, %v348
  %vm367 = vcmask 261120
  %v368 = vsel %vm367, %v351, 0.0
  %369 = vadd.xlane.f32.xlu0 %v368
  %v370 = vpop.xlane.xlu0 %369
  %v371 = vsel %vm367, %v352, 0.0
  %372 = vadd.xlane.f32.xlu0 %v371
  %v373 = vpop.xlane.xlu0 %372
  %v374 = vsel %vm367, %v353, 0.0
  %375 = vadd.xlane.f32.xlu0 %v374
  %v376 = vpop.xlane.xlu0 %375
  %v377 = vsel %vm367, %v354, 0.0
  %378 = vadd.xlane.f32.xlu0 %v377
  %v379 = vpop.xlane.xlu0 %378
  %v380 = vsel %vm367, %v355, 0.0
  %381 = vadd.xlane.f32.xlu0 %v380
  %v382 = vpop.xlane.xlu0 %381
  %v383 = vsel %vm367, %v356, 0.0
  %384 = vadd.xlane.f32.xlu0 %v383
  %v385 = vpop.xlane.xlu0 %384
  %v386 = vsel %vm367, %v357, 0.0
  %387 = vadd.xlane.f32.xlu0 %v386
  %v388 = vpop.xlane.xlu0 %387
  %v389 = vsel %vm367, %v358, 0.0
  %390 = vadd.xlane.f32.xlu0 %v389
  %v391 = vpop.xlane.xlu0 %390
  %v392 = vsel %vm367, %v359, 0.0
  %393 = vadd.xlane.f32.xlu0 %v392
  %v394 = vpop.xlane.xlu0 %393
  %v395 = vsel %vm367, %v360, 0.0
  %396 = vadd.xlane.f32.xlu0 %v395
  %v397 = vpop.xlane.xlu0 %396
  %v398 = vsel %vm367, %v361, 0.0
  %399 = vadd.xlane.f32.xlu0 %v398
  %v400 = vpop.xlane.xlu0 %399
  %v401 = vsel %vm367, %v362, 0.0
  %402 = vadd.xlane.f32.xlu0 %v401
  %v403 = vpop.xlane.xlu0 %402
  %v404 = vsel %vm367, %v363, 0.0
  %405 = vadd.xlane.f32.xlu0 %v404
  %v406 = vpop.xlane.xlu0 %405
  %v407 = vsel %vm367, %v364, 0.0
  %408 = vadd.xlane.f32.xlu0 %v407
  %v409 = vpop.xlane.xlu0 %408
  %v410 = vsel %vm367, %v365, 0.0
  %411 = vadd.xlane.f32.xlu0 %v410
  %v412 = vpop.xlane.xlu0 %411
  %v413 = vsel %vm367, %v366, 0.0
  %414 = vadd.xlane.f32.xlu0 %v413
  %v415 = vpop.xlane.xlu0 %414
  %vm416 = vcmp.gt.f32.partialorder %v370, 1.0
  %vm417 = vcmp.gt.f32.partialorder %v373, 1.0
  %vm418 = vcmp.gt.f32.partialorder %v376, 1.0
  %vm419 = vcmp.gt.f32.partialorder %v379, 1.0
  %vm420 = vcmp.gt.f32.partialorder %v382, 1.0
  %vm421 = vcmp.gt.f32.partialorder %v385, 1.0
  %vm422 = vcmp.gt.f32.partialorder %v388, 1.0
  %vm423 = vcmp.gt.f32.partialorder %v391, 1.0
  %vm424 = vcmp.gt.f32.partialorder %v394, 1.0
  %vm425 = vcmp.gt.f32.partialorder %v397, 1.0
  %vm426 = vcmp.gt.f32.partialorder %v400, 1.0
  %vm427 = vcmp.gt.f32.partialorder %v403, 1.0
  %vm428 = vcmp.gt.f32.partialorder %v406, 1.0
  %vm429 = vcmp.gt.f32.partialorder %v409, 1.0
  %vm430 = vcmp.gt.f32.partialorder %v412, 1.0
  %vm431 = vcmp.gt.f32.partialorder %v415, 1.0
  %v432 = vrsqrt.pop %v370
  %v433 = vrsqrt.pop %v373
  %v434 = vrsqrt.pop %v376
  %v435 = vrsqrt.pop %v379
  %v436 = vrsqrt.pop %v382
  %v437 = vrsqrt.pop %v385
  %v438 = vrsqrt.pop %v388
  %v439 = vrsqrt.pop %v391
  %v440 = vrsqrt.pop %v394
  %v441 = vrsqrt.pop %v397
  %v442 = vrsqrt.pop %v400
  %v443 = vrsqrt.pop %v403
  %v444 = vrsqrt.pop %v406
  %v445 = vrsqrt.pop %v409
  %v446 = vrsqrt.pop %v412
  %v447 = vrsqrt.pop %v415
  %v448 = vsel %vm416, %v432, 1.0
  %v449 = vsel %vm417, %v433, 1.0
  %v450 = vsel %vm418, %v434, 1.0
  %v451 = vsel %vm419, %v435, 1.0
  %v452 = vsel %vm420, %v436, 1.0
  %v453 = vsel %vm421, %v437, 1.0
  %v454 = vsel %vm422, %v438, 1.0
  %v455 = vsel %vm423, %v439, 1.0
  %v456 = vsel %vm424, %v440, 1.0
  %v457 = vsel %vm425, %v441, 1.0
  %v458 = vsel %vm426, %v442, 1.0
  %v459 = vsel %vm427, %v443, 1.0
  %v460 = vsel %vm428, %v444, 1.0
  %v461 = vsel %vm429, %v445, 1.0
  %v462 = vsel %vm430, %v446, 1.0
  %v463 = vsel %vm431, %v447, 1.0
  %v464 = vmul.f32 %v273, %v448
  %v465 = vmul.f32 %v278, %v449
  %v466 = vmul.f32 %v283, %v450
  %v467 = vmul.f32 %v288, %v451
  %v468 = vmul.f32 %v293, %v452
  %v469 = vmul.f32 %v298, %v453
  %v470 = vmul.f32 %v303, %v454
  %v471 = vmul.f32 %v308, %v455
  %v472 = vmul.f32 %v313, %v456
  %v473 = vmul.f32 %v318, %v457
  %v474 = vmul.f32 %v323, %v458
  %v475 = vmul.f32 %v328, %v459
  %v476 = vmul.f32 %v333, %v460
  %v477 = vmul.f32 %v338, %v461
  %v478 = vmul.f32 %v343, %v462
  %v479 = vmul.f32 %v348, %v463
  %v480 = vmul.f32 %v464, %v472
  %v481 = vmul.f32 %v465, %v473
  %v482 = vmul.f32 %v466, %v474
  %v483 = vmul.f32 %v467, %v475
  %v484 = vmul.f32 %v468, %v476
  %v485 = vmul.f32 %v469, %v477
  %v486 = vmul.f32 %v470, %v478
  %v487 = vmul.f32 %v471, %v479
  %v488 = vsel %vm367, %v480, 0.0
  %489 = vadd.xlane.f32.xlu0 %v488
  %v490 = vpop.xlane.xlu0 %489
  %v491 = vsel %vm367, %v481, 0.0
  %492 = vadd.xlane.f32.xlu0 %v491
  %v493 = vpop.xlane.xlu0 %492
  %v494 = vsel %vm367, %v482, 0.0
  %495 = vadd.xlane.f32.xlu0 %v494
  %v496 = vpop.xlane.xlu0 %495
  %v497 = vsel %vm367, %v483, 0.0
  %498 = vadd.xlane.f32.xlu0 %v497
  %v499 = vpop.xlane.xlu0 %498
  %v500 = vsel %vm367, %v484, 0.0
  %501 = vadd.xlane.f32.xlu0 %v500
  %v502 = vpop.xlane.xlu0 %501
  %v503 = vsel %vm367, %v485, 0.0
  %504 = vadd.xlane.f32.xlu0 %v503
  %v505 = vpop.xlane.xlu0 %504
  %v506 = vsel %vm367, %v486, 0.0
  %507 = vadd.xlane.f32.xlu0 %v506
  %v508 = vpop.xlane.xlu0 %507
  %v509 = vsel %vm367, %v487, 0.0
  %510 = vadd.xlane.f32.xlu0 %v509
  %v511 = vpop.xlane.xlu0 %510
  %vm512 = vcmask 7168
  %513 = vst.msk [vmem:[%s2] sm:$0xff] %vm512, %v490
  %514 = vst.msk [vmem:[%s2 + $0x8] sm:$0xff] %vm512, %v493
  %515 = vst.msk [vmem:[%s2 + $0x10] sm:$0xff] %vm512, %v496
  %516 = vst.msk [vmem:[%s2 + $0x18] sm:$0xff] %vm512, %v499
  %517 = vst.msk [vmem:[%s2 + $0x20] sm:$0xff] %vm512, %v502
  %518 = vst.msk [vmem:[%s2 + $0x28] sm:$0xff] %vm512, %v505
  %519 = vst.msk [vmem:[%s2 + $0x30] sm:$0xff] %vm512, %v508
  %520 = vst.msk [vmem:[%s2 + $0x38] sm:$0xff] %vm512, %v511
  // Predicated region
  $region10: #{tpu_custom_call.1} parent=0 // pred_check
    _
  $region11: #{tpu_custom_call.1} parent=0 // pred_check_branch
    %522 = sbr.rel (0) target = $region13
  $region12: #{tpu_custom_call.1} parent=0 // pred_region
    _
  $region13: #{tpu_custom_call.1} parent=0 // pred_fallthru
    _
  // Predicated region
  $region14: #{tpu_custom_call.1} parent=0 // pred_check
    _
  $region15: #{tpu_custom_call.1} parent=0 // pred_check_branch
    %524 = sbr.rel (0) target = $region17
  $region16: #{tpu_custom_call.1} parent=0 // pred_region
    _
  $region17: #{tpu_custom_call.1} parent=0 // pred_fallthru
    _

</llo_original>
